<compile_context>
chip_gen: v7x
topology: tpu7x:2x2x1
jax: 0.10.0
libtpu: 0.0.40
codegen_flags: <defaults>
</compile_context>

<pallas_src>
import functools
import numpy as np
import jax
import jax.numpy as jnp
from jax.experimental import pallas as pl
from jax.experimental.pallas import tpu as pltpu


def _round_up(v, m):
    return ((v + m - 1) // m) * m


def _cdiv(a, b):
    return -(-a // b)


def _tpu_vmem_capacity_bytes():
    try:
        info = pltpu.get_tpu_info()
        v = getattr(info, "vmem_capacity_bytes", None)
        if isinstance(v, int) and v > 0:
            return v
    except Exception:
        pass
    return 64 * 1024 * 1024          # conservative default (v7x per-core VMEM)


def _tensorcores_per_device():
    try:
        info = pltpu.get_tpu_info()
        for attr in ("num_cores", "num_tensorcores", "tensorcore_count", "core_count"):
            v = getattr(info, attr, None)
            if isinstance(v, int) and v > 0:
                return v
    except Exception:
        pass
    return 1                         # unknown -> assume single TC (v5e/v6e)


# ----------------------------- Pallas kernel --------------------------------
def _make_kernel(cout, tile_j, shifts):
    """Fused gated conv-transpose tile kernel.

    x0_ref : (1, Cin, TJ)    current pixel block         (stream dtype)
    x1_ref : (1, Cin, HALO)  halo block (next pixels)     (stream dtype)
    w_ref  : (2*Cout, K*K*Cin)  [Wh ; Wg], (kh,kw)-major rows, ci-minor (stream dtype)
    b_ref  : (2*Cout, 1)  f32
    o_ref  : (1, Cout, TJ)  lane-dense output tile (f32)
    """

    def kernel(x0_ref, x1_ref, w_ref, b_ref, o_ref):
        x0 = x0_ref[0]                                        # (Cin, TJ)
        x1 = x1_ref[0]                                        # (Cin, HALO)
        x = jnp.concatenate([x0, x1], axis=-1)                # (Cin, TJ+HALO)

        # In-VMEM im2col: K*K statically-shifted windows stacked on sublanes,
        # kept in the stream dtype (bf16 stays bf16 all the way into the MXU).
        patches = jnp.concatenate(
            [x[:, sh:sh + tile_j] for sh in shifts], axis=0)  # (K*K*Cin, TJ)

        # One fused MXU matmul for both h and g; f32 accumulation.
        acc = jnp.dot(w_ref[...], patches,
                      preferred_element_type=jnp.float32) + b_ref[...]

        h = acc[:cout, :]          # sublane split at Cout (one f32 group)
        g = acc[cout:, :]
        # TODO(synk): module's optional `activation` is None here -> identity on h.
        o_ref[0] = (h * jax.nn.sigmoid(g)).astype(o_ref.dtype)

    return kernel


# ------------------------------ JAX wrapper ----------------------------------
def gated_conv_transpose2d(x, w_h, b_h, w_g, b_g, *,
                           stride, padding, output_padding=0, dilation=1,
                           tile_j=4096, stream_dtype=jnp.float32):
    """x: (N, Cin, H, W) f32; w_*: (Cin, Cout, K, K) (PyTorch ConvTranspose2d
    weight layout); b_*: (Cout,).  Returns (N, Cout, Hout, Wout) f32.

    tile_j:       requested output-pixel tile width (clamped to the VMEM budget
                  and rounded to a multiple of the halo block).
    stream_dtype: dtype of the activation/weight HBM stream and of the MXU
                  operands (f32 or bf16); accumulation + epilogue are f32.
    """
    N, Cin, H, W = x.shape
    _, Cout, K, _ = w_h.shape
    s, p, op, d = stride, padding, output_padding, dilation

    Hout = (H - 1) * s - 2 * p + d * (K - 1) + op + 1
    Wout = (W - 1) * s - 2 * p + d * (K - 1) + op + 1

    pad_lo = d * (K - 1) - p
    pad_hi = d * (K - 1) - p + op
    # Scope limitation (documented): PyTorch allows padding > dilation*(K-1).
    assert pad_lo >= 0, "padding > dilation*(K-1) not supported by this kernel"

    Hup, Wup = (H - 1) * s + 1, (W - 1) * s + 1
    Hpad, Wpad = Hout + d * (K - 1), Wout + d * (K - 1)

    Jin = Hpad * Wpad
    Jout = Hout * Wpad
    halo = d * (K - 1) * Wpad + d * (K - 1)
    halo_block = _round_up(max(halo, 1), 128)

    # --- tile sizing from the per-generation VMEM budget -----------------
    sbytes = jnp.dtype(stream_dtype).itemsize
    obytes = jnp.dtype(x.dtype).itemsize
    vmem_cap = _tpu_vmem_capacity_bytes()
    vmem_limit = int(max(min(vmem_cap * 3 // 4, 96 * 1024 * 1024),
                         16 * 1024 * 1024))
    per_lane = (2 * Cin * sbytes            # x0 block, double-buffered
                + 2 * Cin * sbytes          # concat temp + halo buffers
                + 2 * Cout * obytes         # out block, double-buffered
                + K * K * Cin * sbytes      # patches
                + 4 * Cout * 4)             # f32 acc + epilogue temporaries
    budget_tile = max(128, (vmem_limit // 2) // max(per_lane, 1))

    tile_req = min(max(tile_j, halo_block), budget_tile,
                   _round_up(Jout, halo_block))
    tile_j = max(halo_block, _round_up(tile_req, halo_block))

    # Only split the (single) pixel block when the chip actually has >=2
    # TensorCores to feed (v7x); on v5e/v6e keep the larger tile.
    if (_tensorcores_per_device() >= 2 and Jout > halo_block
            and N * _cdiv(Jout, tile_j) < 2):
        tile_j = max(halo_block, _round_up(_cdiv(Jout, 2), halo_block))

    num_jb = _cdiv(Jout, tile_j)
    Jin_pad = num_jb * tile_j + halo_block      # room for the last halo block

    # --- zero-insert (stride) + pad, directly in the stream dtype; stay NCHW.
    xs = x.astype(stream_dtype)
    x_pad = jnp.zeros((N, Cin, Hpad, Wpad), stream_dtype)
    x_pad = x_pad.at[:, :, pad_lo:pad_lo + Hup:s, pad_lo:pad_lo + Wup:s].set(xs)
    xf = jnp.pad(x_pad.reshape(N, Cin, Jin),
                 ((0, 0), (0, 0), (0, Jin_pad - Jin)))

    # --- fused [Wh ; Wg] weight matrix: (2*Cout, K*K*Cin), rows (kh,kw)-major.
    def to_res(w):
        wf = w[:, :, ::-1, ::-1]                    # spatial flip
        wf = jnp.transpose(wf, (2, 3, 0, 1))        # (K, K, Cin, Cout)
        return wf.reshape(K * K * Cin, Cout).T      # (Cout, K*K*Cin)

    w_res = jnp.concatenate([to_res(w_h), to_res(w_g)], axis=0).astype(stream_dtype)
    b_cat = jnp.concatenate([b_h, b_g]).reshape(2 * Cout, 1).astype(jnp.float32)

    shifts = [kh * d * Wpad + kw * d for kh in range(K) for kw in range(K)]
    kernel = _make_kernel(Cout, tile_j, shifts)
    kdim = K * K * Cin
    halo_ratio = tile_j // halo_block               # tile_j % halo_block == 0

    out = pl.pallas_call(
        kernel,
        out_shape=jax.ShapeDtypeStruct((N, Cout, Jout), x.dtype),
        grid_spec=pltpu.PrefetchScalarGridSpec(
            num_scalar_prefetch=0,
            grid=(N, num_jb),
            in_specs=[
                # current pixel block
                pl.BlockSpec((1, Cin, tile_j), lambda n, j: (n, 0, j)),
                # small halo block starting right after the current tile
                pl.BlockSpec((1, Cin, halo_block),
                             lambda n, j, r=halo_ratio: (n, 0, (j + 1) * r)),
                # tiny constant-index weight/bias blocks (VMEM-resident)
                pl.BlockSpec((2 * Cout, kdim), lambda n, j: (0, 0)),
                pl.BlockSpec((2 * Cout, 1), lambda n, j: (0, 0)),
            ],
            out_specs=pl.BlockSpec((1, Cout, tile_j), lambda n, j: (n, 0, j)),
        ),
        compiler_params=pltpu.CompilerParams(
            dimension_semantics=("parallel", "parallel"),
            vmem_limit_bytes=vmem_limit),
    )(xf, xf, w_res, b_cat)

    # Drop the Wpad-pitch junk columns -> NCHW result (single fused slice pass).
    # TODO(synk): a row-blocked 2D out_spec writing (Cout, TH, Wout) compactly
    #             would remove this last pass; kept flat for MXU-friendly tiles.
    return out.reshape(N, Cout, Hout, Wpad)[:, :, :, :Wout]


# ------------------------- independent numpy reference -----------------------
def _ref_gated_conv_transpose(x, wh, bh, wg, bg, s, p, op, d):
    def convT(x, w, b):
        N, Cin, H, W = x.shape
        _, Cout, K, _ = w.shape
        Hfull = (H - 1) * s + d * (K - 1) + 1
        Wfull = (W - 1) * s + d * (K - 1) + 1
        out = np.zeros((N, Cout, Hfull + op, Wfull + op), np.float32)
        for kh in range(K):
            for kw in range(K):
                contrib = np.einsum('nchw,cd->ndhw', x, w[:, :, kh, kw])
                out[:, :, kh * d:kh * d + H * s:s,
                       kw * d:kw * d + W * s:s] += contrib
        out = out + b[None, :, None, None]
        Hout = Hfull - 2 * p + op
        Wout = Wfull - 2 * p + op
        return out[:, :, p:p + Hout, p:p + Wout]

    h = convT(x, wh, bh)
    g = convT(x, wg, bg)
    return h * (1.0 / (1.0 + np.exp(-g)))


# ---------------------------------- main --------------------------------------
if __name__ == "__main__":
    # module config (activation=None), small shapes
    N, Cin, Cout, H, W = 2, 4, 8, 16, 16
    K, stride, padding, output_padding, dilation = 3, 2, 1, 1, 1

    key = jax.random.PRNGKey(0)
    kx, kwh, kbh, kwg, kbg = jax.random.split(key, 5)
    x = jax.random.normal(kx, (N, Cin, H, W), jnp.float32)
    # PyTorch ConvTranspose2d weight shape: (in_channels, out_channels, kH, kW)
    w_h = jax.random.uniform(kwh, (Cin, Cout, K, K), jnp.float32, -0.1, 0.1)
    b_h = jax.random.uniform(kbh, (Cout,), jnp.float32, -0.1, 0.1)
    w_g = jax.random.uniform(kwg, (Cin, Cout, K, K), jnp.float32, -0.1, 0.1)
    b_g = jax.random.uniform(kbg, (Cout,), jnp.float32, -0.1, 0.1)

    ref = _ref_gated_conv_transpose(
        np.asarray(x), np.asarray(w_h), np.asarray(b_h),
        np.asarray(w_g), np.asarray(b_g),
        stride, padding, output_padding, dilation)

    # f32 stream/operands: matches the PyTorch module's f32 semantics.
    fn32 = jax.jit(functools.partial(
        gated_conv_transpose2d, stride=stride, padding=padding,
        output_padding=output_padding, dilation=dilation,
        stream_dtype=jnp.float32))
    out32 = jax.block_until_ready(fn32(x, w_h, b_h, w_g, b_g))
    assert out32.shape == ref.shape, (out32.shape, ref.shape)
    np.testing.assert_allclose(np.asarray(out32), ref, rtol=1e-4, atol=1e-4)

    # bf16 stream: activations AND weights stay bf16 through the gather and the
    # MXU (f32 accumulation/epilogue), halving the dominant HBM stream.
    fnbf = jax.jit(functools.partial(
        gated_conv_transpose2d, stride=stride, padding=padding,
        output_padding=output_padding, dilation=dilation,
        stream_dtype=jnp.bfloat16))
    outbf = jax.block_until_ready(fnbf(x, w_h, b_h, w_g, b_g))
    np.testing.assert_allclose(np.asarray(outbf), ref, rtol=3e-2, atol=3e-2)

    print("KERNEL_OK")
</pallas_src>

<mosaic_0001>
module attributes {stable_mosaic.version = 11 : i64} {
  func.func @kernel(%arg0: i32, %arg1: i32, %arg2: memref<1x4x1152xf32, #tpu.memory_space<vmem>>, %arg3: memref<1x4x128xf32, #tpu.memory_space<vmem>>, %arg4: memref<16x36xf32, #tpu.memory_space<vmem>>, %arg5: memref<16x1xf32, #tpu.memory_space<vmem>>, %arg6: memref<1x8x1152xf32, #tpu.memory_space<vmem>>) attributes {dimension_semantics = [#tpu.dimension_semantics<parallel>, #tpu.dimension_semantics<parallel>], iteration_bounds = array<i64: 2, 1>, scalar_prefetch = 0 : i64, scratch_operands = 0 : i64, tpu.core_type = #tpu.core_type<tc>, window_params = [{transform_indices = @transform_0, window_bounds = array<i64: 1, 4, 1152>}, {transform_indices = @transform_1, window_bounds = array<i64: 1, 4, 128>}, {pipeline_mode = #tpu.pipeline_mode<synchronous>, transform_indices = @transform_2, window_bounds = array<i64: 16, 36>}, {pipeline_mode = #tpu.pipeline_mode<synchronous>, transform_indices = @transform_3, window_bounds = array<i64: 16, 1>}, {transform_indices = @transform_4, window_bounds = array<i64: 1, 8, 1152>}]} {
    %c0 = arith.constant 0 : index
    %c0_0 = arith.constant 0 : index
    %c0_1 = arith.constant 0 : index
    %0 = vector.load %arg2[%c0, %c0_0, %c0_1] : memref<1x4x1152xf32, #tpu.memory_space<vmem>>, vector<1x4x1152xf32>
    %1 = vector.shape_cast %0 : vector<1x4x1152xf32> to vector<4x1152xf32>
    %c0_2 = arith.constant 0 : index
    %c0_3 = arith.constant 0 : index
    %c0_4 = arith.constant 0 : index
    %2 = vector.load %arg3[%c0_2, %c0_3, %c0_4] : memref<1x4x128xf32, #tpu.memory_space<vmem>>, vector<1x4x128xf32>
    %3 = vector.shape_cast %2 : vector<1x4x128xf32> to vector<4x128xf32>
    %4 = tpu.concatenate %1, %3 in 1 : vector<4x1152xf32>, vector<4x128xf32> -> vector<4x1280xf32>
    %5 = vector.extract_strided_slice %4 {offsets = [0, 0], sizes = [4, 1152], strides = [1, 1]} : vector<4x1280xf32> to vector<4x1152xf32>
    %6 = vector.extract_strided_slice %4 {offsets = [0, 1], sizes = [4, 1152], strides = [1, 1]} : vector<4x1280xf32> to vector<4x1152xf32>
    %7 = vector.extract_strided_slice %4 {offsets = [0, 2], sizes = [4, 1152], strides = [1, 1]} : vector<4x1280xf32> to vector<4x1152xf32>
    %8 = vector.extract_strided_slice %4 {offsets = [0, 34], sizes = [4, 1152], strides = [1, 1]} : vector<4x1280xf32> to vector<4x1152xf32>
    %9 = vector.extract_strided_slice %4 {offsets = [0, 35], sizes = [4, 1152], strides = [1, 1]} : vector<4x1280xf32> to vector<4x1152xf32>
    %10 = vector.extract_strided_slice %4 {offsets = [0, 36], sizes = [4, 1152], strides = [1, 1]} : vector<4x1280xf32> to vector<4x1152xf32>
    %11 = vector.extract_strided_slice %4 {offsets = [0, 68], sizes = [4, 1152], strides = [1, 1]} : vector<4x1280xf32> to vector<4x1152xf32>
    %12 = vector.extract_strided_slice %4 {offsets = [0, 69], sizes = [4, 1152], strides = [1, 1]} : vector<4x1280xf32> to vector<4x1152xf32>
    %13 = vector.extract_strided_slice %4 {offsets = [0, 70], sizes = [4, 1152], strides = [1, 1]} : vector<4x1280xf32> to vector<4x1152xf32>
    %14 = tpu.concatenate %5, %6, %7, %8, %9, %10, %11, %12, %13 in 0 : vector<4x1152xf32>, vector<4x1152xf32>, vector<4x1152xf32>, vector<4x1152xf32>, vector<4x1152xf32>, vector<4x1152xf32>, vector<4x1152xf32>, vector<4x1152xf32>, vector<4x1152xf32> -> vector<36x1152xf32>
    %c0_5 = arith.constant 0 : index
    %c0_6 = arith.constant 0 : index
    %15 = vector.load %arg4[%c0_5, %c0_6] : memref<16x36xf32, #tpu.memory_space<vmem>>, vector<16x36xf32>
    %cst = arith.constant dense<0.000000e+00> : vector<16x1152xf32>
    %16 = tpu.matmul %15, %14, %cst {dimension_numbers = #tpu.dot_dimension_numbers<[1], [0], [0], [1], [0, 0, 1, 1], [], []>} : vector<16x36xf32>, vector<36x1152xf32>, vector<16x1152xf32> -> vector<16x1152xf32>
    %c0_7 = arith.constant 0 : index
    %c0_8 = arith.constant 0 : index
    %17 = vector.load %arg5[%c0_7, %c0_8] : memref<16x1xf32, #tpu.memory_space<vmem>>, vector<16x1xf32>
    %18 = vector.broadcast %17 : vector<16x1xf32> to vector<16x1152xf32>
    %19 = arith.addf %16, %18 : vector<16x1152xf32>
    %20 = vector.extract_strided_slice %19 {offsets = [0, 0], sizes = [8, 1152], strides = [1, 1]} : vector<16x1152xf32> to vector<8x1152xf32>
    %21 = vector.extract_strided_slice %19 {offsets = [8, 0], sizes = [8, 1152], strides = [1, 1]} : vector<16x1152xf32> to vector<8x1152xf32>
    %22 = arith.negf %21 : vector<8x1152xf32>
    %23 = math.exp %22 : vector<8x1152xf32>
    %cst_9 = arith.constant 1.000000e+00 : f32
    %24 = vector.broadcast %cst_9 : f32 to vector<8x1152xf32>
    %25 = arith.addf %24, %23 : vector<8x1152xf32>
    %26 = arith.divf %24, %25 : vector<8x1152xf32>
    %27 = arith.mulf %20, %26 : vector<8x1152xf32>
    %c0_10 = arith.constant 0 : index
    %c0_11 = arith.constant 0 : index
    %c0_12 = arith.constant 0 : index
    %28 = vector.load %arg6[%c0_10, %c0_11, %c0_12] : memref<1x8x1152xf32, #tpu.memory_space<vmem>>, vector<1x8x1152xf32>
    %29 = vector.shape_cast %28 : vector<1x8x1152xf32> to vector<8x1152xf32>
    %30 = vector.shape_cast %27 : vector<8x1152xf32> to vector<1x8x1152xf32>
    tpu.vector_store %arg6[%c0_10, %c0_11, %c0_12], %30 {strides = array<i32>} : memref<1x8x1152xf32, #tpu.memory_space<vmem>>, vector<1x8x1152xf32>,
    return
  }
  func.func @transform_0(%arg0: i32, %arg1: i32) -> (i32, i32, i32) {
    %c0_i32 = arith.constant 0 : i32
    %c0_i32_0 = arith.constant 0 : i32
    return %arg0, %c0_i32, %arg1 : i32, i32, i32
  }
  func.func @transform_1(%arg0: i32, %arg1: i32) -> (i32, i32, i32) {
    %c1_i32 = arith.constant 1 : i32
    %0 = arith.addi %arg1, %c1_i32 : i32
    %c9_i32 = arith.constant 9 : i32
    %1 = arith.muli %0, %c9_i32 : i32
    %c0_i32 = arith.constant 0 : i32
    %c0_i32_0 = arith.constant 0 : i32
    return %arg0, %c0_i32, %1 : i32, i32, i32
  }
  func.func @transform_2(%arg0: i32, %arg1: i32) -> (i32, i32) {
    %c0_i32 = arith.constant 0 : i32
    %c0_i32_0 = arith.constant 0 : i32
    %c0_i32_1 = arith.constant 0 : i32
    return %c0_i32, %c0_i32_0 : i32, i32
  }
  func.func @transform_3(%arg0: i32, %arg1: i32) -> (i32, i32) {
    %c0_i32 = arith.constant 0 : i32
    %c0_i32_0 = arith.constant 0 : i32
    %c0_i32_1 = arith.constant 0 : i32
    return %c0_i32, %c0_i32_0 : i32, i32
  }
  func.func @transform_4(%arg0: i32, %arg1: i32) -> (i32, i32, i32) {
    %c0_i32 = arith.constant 0 : i32
    %c0_i32_0 = arith.constant 0 : i32
    return %arg0, %c0_i32, %arg1 : i32, i32, i32
  }
}

</mosaic_0001>

<llo_original>
// kernel: gated_conv_transpose2d.1
$region0: #{gated_conv_transpose2d.1}
  #allocation0 [shape = 'u32[]', space=smem, size = 0x4, offset = 0x4, fixed_abs, tag = 'smem constant byte address 0x4 - core index']
  #allocation1 [shape = 'u32[144,128]{1,0:T(1,128)}', space=vmem, size = 0x12000, scoped, tag = 'internal scratch']
  %s0 = inlined_call_operand.vmem [shape: f32[2,4,1280], index: 0, kind: input, shape index: {}, may-alias: {0,1}]
  %s1 = inlined_call_operand.vmem [shape: f32[2,4,1280], index: 1, kind: input, shape index: {}, may-alias: {0,1}]
  %s2 = inlined_call_operand.vmem [shape: f32[16,36], index: 2, kind: input, shape index: {}]
  %s3 = inlined_call_operand.vmem [shape: f32[16,1], index: 3, kind: input, shape index: {}]
  %s4 = inlined_call_operand.vmem [shape: f32[2,8,1088], index: 4, kind: output, shape index: {}]
  %s5 = sld [smem:[#allocation0]]
  $region49: #{gated_conv_transpose2d.1} parent=0
    _
  %s7 = ssub.s32 1, %s5
  %s8 = scalar_select 0, %s7, %s5
  loop: start=0, step=1, limit=4
  $region2: #{gated_conv_transpose2d.1} parent=0 // loop_pre_header
    _
  $region3: #{gated_conv_transpose2d.1} parent=0 // loop_header
    %s10 = sphi 0, %s14
    %p11 = scmp.ge.s32.totalorder %s10, 4
    %s17 = sphi 0, %s29
    %s18 = sphi 0, %s25
    %s19 = sphi 0, %s17
    %s20 = sphi 0, %s18
    %s21 = sphi 0, %s19
    %s22 = sphi 0, %s20
    %s34 = sphi 0, %s36
    %s37 = sphi 0, %s34
    %s38 = sphi 0, %s37
    %s54 = sphi 0, %s38
    %s66 = sphi 0, %s68
    %s69 = sphi 0, %s66
    %s70 = sphi 0, %s69
    %s86 = sphi 0, %s70
    %s90 = sphi 0, %s90
    %s92 = sphi 0, %s90
    %s93 = sphi 0, %s92
    %s107 = sphi 0, %s93
    %s111 = sphi 0, %s111
    %s113 = sphi 0, %s111
    %s114 = sphi 0, %s113
    %s128 = sphi 0, %s114
    %s136 = sphi 0, %s138
    %s139 = sphi 0, %s136
    %s140 = sphi 0, %s139
    %s156 = sphi 0, %s140
  $region4: #{gated_conv_transpose2d.1} parent=0 // loop_header_branch
    %13 = sbr.rel (%p11) target = $region8
  $region5: #{gated_conv_transpose2d.1} parent=0 // loop_body
    %s15 = ssub.s32 %s10, 1
    %s16 = ssub.s32 %s10, 2
    %s23 = sadd.s32 1, %s18
    %p24 = scmp.ge.s32.totalorder %s23, 1
    %s25 = scalar_select %p24, 0, %s23
    %s26 = sadd.s32 1, %s17
    %s27 = scalar_select %p24, %s26, %s17
    %p28 = scmp.ge.s32.totalorder %s27, 2
    %s29 = scalar_select %p28, 0, %s27
    %s30 = ssub.s32 %s17, %s29
    %s31 = ssub.s32 %s18, %s25
    %s32 = sor.u32 %s30, %s31
    %p33 = scmp.eq.s32.totalorder %s32, 0
    %s35 = sadd.s32 %s34, 1
    %s36 = scalar_select %p33, %s34, %s35
    %p39 = pneg %p33
    %p40 = scmp.eq.s32.totalorder %s10, 1
    %p41 = por %p39, %p40
    %p42 = scmp.ne.s32.totalorder %s34, %s37
    %p43 = scmp.eq.s32.totalorder %s10, 0
    %p44 = por %p42, %p43
    %p45 = scmp.ne.s32.totalorder %s34, %s37
    %p46 = scmp.eq.s32.totalorder %s15, 1
    %p47 = por %p45, %p46
    %p48 = scmp.ne.s32.totalorder %s37, %s38
    %p49 = scmp.eq.s32.totalorder %s15, 0
    %p50 = por %p48, %p49
    %p51 = scmp.ne.s32.totalorder %s37, %s38
    %p52 = scmp.eq.s32.totalorder %s16, 1
    %p53 = por %p51, %p52
    %p55 = scmp.ne.s32.totalorder %s38, %s54
    %p56 = scmp.eq.s32.totalorder %s16, 0
    %p57 = por %p55, %p56
    %s58 = sadd.s32 %s18, 1
    %s59 = smul.u32 %s58, 9
    %s60 = sadd.s32 %s25, 1
    %s61 = smul.u32 %s60, 9
    %s62 = ssub.s32 %s17, %s29
    %s63 = ssub.s32 %s59, %s61
    %s64 = sor.u32 %s62, %s63
    %p65 = scmp.eq.s32.totalorder %s64, 0
    %s67 = sadd.s32 %s66, 1
    %s68 = scalar_select %p65, %s66, %s67
    %p71 = pneg %p65
    %p72 = scmp.eq.s32.totalorder %s10, 1
    %p73 = por %p71, %p72
    %p74 = scmp.ne.s32.totalorder %s66, %s69
    %p75 = scmp.eq.s32.totalorder %s10, 0
    %p76 = por %p74, %p75
    %p77 = scmp.ne.s32.totalorder %s66, %s69
    %p78 = scmp.eq.s32.totalorder %s15, 1
    %p79 = por %p77, %p78
    %p80 = scmp.ne.s32.totalorder %s69, %s70
    %p81 = scmp.eq.s32.totalorder %s15, 0
    %p82 = por %p80, %p81
    %p83 = scmp.ne.s32.totalorder %s69, %s70
    %p84 = scmp.eq.s32.totalorder %s16, 1
    %p85 = por %p83, %p84
    %p87 = scmp.ne.s32.totalorder %s70, %s86
    %p88 = scmp.eq.s32.totalorder %s16, 0
    %p89 = por %p87, %p88
    %s91 = sadd.s32 %s90, 1
    %p94 = scmp.eq.s32.totalorder %s10, 1
    %p95 = scmp.ne.s32.totalorder %s90, %s92
    %p96 = scmp.eq.s32.totalorder %s10, 0
    %p97 = por %p95, %p96
    %p98 = scmp.ne.s32.totalorder %s90, %s92
    %p99 = scmp.eq.s32.totalorder %s15, 1
    %p100 = por %p98, %p99
    %p101 = scmp.ne.s32.totalorder %s92, %s93
    %p102 = scmp.eq.s32.totalorder %s15, 0
    %p103 = por %p101, %p102
    %p104 = scmp.ne.s32.totalorder %s92, %s93
    %p105 = scmp.eq.s32.totalorder %s16, 1
    %p106 = por %p104, %p105
    %p108 = scmp.ne.s32.totalorder %s93, %s107
    %p109 = scmp.eq.s32.totalorder %s16, 0
    %p110 = por %p108, %p109
    %s112 = sadd.s32 %s111, 1
    %p115 = scmp.eq.s32.totalorder %s10, 1
    %p116 = scmp.ne.s32.totalorder %s111, %s113
    %p117 = scmp.eq.s32.totalorder %s10, 0
    %p118 = por %p116, %p117
    %p119 = scmp.ne.s32.totalorder %s111, %s113
    %p120 = scmp.eq.s32.totalorder %s15, 1
    %p121 = por %p119, %p120
    %p122 = scmp.ne.s32.totalorder %s113, %s114
    %p123 = scmp.eq.s32.totalorder %s15, 0
    %p124 = por %p122, %p123
    %p125 = scmp.ne.s32.totalorder %s113, %s114
    %p126 = scmp.eq.s32.totalorder %s16, 1
    %p127 = por %p125, %p126
    %p129 = scmp.ne.s32.totalorder %s114, %s128
    %p130 = scmp.eq.s32.totalorder %s16, 0
    %p131 = por %p129, %p130
    %s132 = ssub.s32 %s17, %s29
    %s133 = ssub.s32 %s18, %s25
    %s134 = sor.u32 %s132, %s133
    %p135 = scmp.eq.s32.totalorder %s134, 0
    %s137 = sadd.s32 %s136, 1
    %s138 = scalar_select %p135, %s136, %s137
    %p141 = pneg %p135
    %p142 = scmp.eq.s32.totalorder %s10, 1
    %p143 = por %p141, %p142
    %p144 = scmp.ne.s32.totalorder %s136, %s139
    %p145 = scmp.eq.s32.totalorder %s10, 0
    %p146 = por %p144, %p145
    %p147 = scmp.ne.s32.totalorder %s136, %s139
    %p148 = scmp.eq.s32.totalorder %s15, 1
    %p149 = por %p147, %p148
    %p150 = scmp.ne.s32.totalorder %s139, %s140
    %p151 = scmp.eq.s32.totalorder %s15, 0
    %p152 = por %p150, %p151
    %p153 = scmp.ne.s32.totalorder %s139, %s140
    %p154 = scmp.eq.s32.totalorder %s16, 1
    %p155 = por %p153, %p154
    %p157 = scmp.ne.s32.totalorder %s140, %s156
    %p158 = scmp.eq.s32.totalorder %s16, 0
    %p159 = por %p157, %p158
    %p160 = scmp.le.s32.totalorder 1, %s10
    %p161 = scmp.lt.s32.totalorder %s10, 3
    %p162 = pnand %p160, %p161
    %p163 = pneg %p162
    // Predicated region
    $region9: #{gated_conv_transpose2d.1} parent=5 // pred_check
      _
    $region10: #{gated_conv_transpose2d.1} parent=5 // pred_check_branch
      %165 = sbr.rel (%p162) target = $region12
    $region11: #{gated_conv_transpose2d.1} parent=5 // pred_region
      %s166 = ssub.s32 %s10, 1
      // Predicated region
      $region13: #{gated_conv_transpose2d.1} parent=11 // pred_check
        %p167 = pneg %p103
      $region14: #{gated_conv_transpose2d.1} parent=11 // pred_check_branch
        %169 = sbr.rel (%p167) target = $region16
      $region15: #{gated_conv_transpose2d.1} parent=11 // pred_region
        _
      $region16: #{gated_conv_transpose2d.1} parent=11 // pred_fallthru
        _
      // Predicated region
      $region17: #{gated_conv_transpose2d.1} parent=11 // pred_check
        %p170 = pneg %p124
      $region18: #{gated_conv_transpose2d.1} parent=11 // pred_check_branch
        %172 = sbr.rel (%p170) target = $region20
      $region19: #{gated_conv_transpose2d.1} parent=11 // pred_region
        _
      $region20: #{gated_conv_transpose2d.1} parent=11 // pred_fallthru
        _
    $region12: #{gated_conv_transpose2d.1} parent=5 // pred_fallthru
      _
    %p173 = scmp.lt.s32.totalorder %s10, 2
    // Predicated region
    $region21: #{gated_conv_transpose2d.1} parent=5 // pred_check
      %p174 = pneg %p173
    $region22: #{gated_conv_transpose2d.1} parent=5 // pred_check_branch
      %176 = sbr.rel (%p174) target = $region24
    $region23: #{gated_conv_transpose2d.1} parent=5 // pred_region
      // Predicated region
      $region25: #{gated_conv_transpose2d.1} parent=23 // pred_check
        %p177 = pneg %p44
      $region26: #{gated_conv_transpose2d.1} parent=23 // pred_check_branch
        %179 = sbr.rel (%p177) target = $region28
      $region27: #{gated_conv_transpose2d.1} parent=23 // pred_region
        %s180 = smul.u32 9, %s18
        %s181 = ssub.s32 10, %s180
        %p182 = scmp.lt.s32.totalorder %s181, 9
        %s183 = scalar_select %p182, %s181, 9
        %s184 = smul.u32 64, %s183
        %p185 = scmp.lt.s32.totalorder %s17, 1
        %s186 = scalar_select %p185, %s17, 1
        %p187 = scmp.lt.s32.totalorder %s180, 9
        %s188 = scalar_select %p187, %s180, 9
        %s189 = smul.addr %s186, 10
        %s190 = sadd.s32 %s188, %s189
        %s191 = smul.addr %s190, 4
        %s192 = scalar_lea.vmem %s0, %s191
        %s193 = smul.u32 9, %s18
        %s194 = ssub.s32 10, %s193
        %p195 = scmp.lt.s32.totalorder %s194, 9
        %s196 = scalar_select %p195, %s194, 9
        %s197 = smul.u32 64, %s196
      $region28: #{gated_conv_transpose2d.1} parent=23 // pred_fallthru
        _
      // Predicated region
      $region29: #{gated_conv_transpose2d.1} parent=23 // pred_check
        %p198 = pneg %p76
      $region30: #{gated_conv_transpose2d.1} parent=23 // pred_check_branch
        %200 = sbr.rel (%p198) target = $region32
      $region31: #{gated_conv_transpose2d.1} parent=23 // pred_region
        %s201 = sadd.s32 %s18, 1
        %s202 = smul.u32 %s201, 9
        %p203 = scmp.lt.s32.totalorder %s17, 1
        %s204 = scalar_select %p203, %s17, 1
        %p205 = scmp.lt.s32.totalorder %s202, 9
        %s206 = scalar_select %p205, %s202, 9
        %s207 = smul.addr %s204, 10
        %s208 = sadd.s32 %s206, %s207
        %s209 = smul.addr %s208, 4
        %s210 = scalar_lea.vmem %s1, %s209
        %s211 = sadd.s32 %s18, 1
        %s212 = smul.u32 %s211, 9
      $region32: #{gated_conv_transpose2d.1} parent=23 // pred_fallthru
        _
    $region24: #{gated_conv_transpose2d.1} parent=5 // pred_fallthru
      _
    %p213 = scmp.le.s32.totalorder 1, %s10
    %p214 = scmp.lt.s32.totalorder %s10, 3
    %p215 = pnand %p213, %p214
    %p216 = pneg %p215
    // Predicated region
    $region33: #{gated_conv_transpose2d.1} parent=5 // pred_check
      _
    $region34: #{gated_conv_transpose2d.1} parent=5 // pred_check_branch
      %218 = sbr.rel (%p215) target = $region36
    $region35: #{gated_conv_transpose2d.1} parent=5 // pred_region
      %s219 = ssub.s32 %s10, 1
      %s220 = smul.u32 9, %s20
      %s221 = ssub.s32 10, %s220
      %p222 = scmp.lt.s32.totalorder %s221, 9
      %s223 = scalar_select %p222, %s221, 9
      %s224 = smul.u32 64, %s223
      %p225 = scmp.lt.s32.totalorder %s19, 1
      %s226 = scalar_select %p225, %s19, 1
      %p227 = scmp.lt.s32.totalorder %s220, 9
      %s228 = scalar_select %p227, %s220, 9
      %s229 = smul.addr %s226, 10
      %s230 = sadd.s32 %s228, %s229
      %s231 = smul.addr %s230, 4
      %s232 = scalar_lea.vmem %s0, %s231
      %p233 = pneg %p50
      %p234 = pneg %p47
      %s235 = sadd.s32 %s20, 1
      %s236 = smul.u32 %s235, 9
      %p237 = scmp.lt.s32.totalorder %s19, 1
      %s238 = scalar_select %p237, %s19, 1
      %p239 = scmp.lt.s32.totalorder %s236, 9
      %s240 = scalar_select %p239, %s236, 9
      %s241 = smul.addr %s238, 10
      %s242 = sadd.s32 %s240, %s241
      %s243 = smul.addr %s242, 4
      %s244 = scalar_lea.vmem %s1, %s243
      %p245 = pneg %p82
      %p246 = pneg %p79
      %p247 = pneg %p103
      %p248 = pneg %p100
      %p249 = pneg %p124
      %p250 = pneg %p121
      %p251 = pneg %p152
      %p252 = pneg %p149
      %s253 = smul.u32 9, %s20
      %p254 = scmp.lt.s32.totalorder %s19, 1
      %s255 = scalar_select %p254, %s19, 1
      %p256 = scmp.lt.s32.totalorder %s253, 8
      %s257 = scalar_select %p256, %s253, 8
      %s258 = smul.addr %s255, 9
      %s259 = sadd.s32 %s257, %s258
      %s260 = smul.addr %s259, 8
      %s261 = scalar_lea.vmem %s4, %s260
      %s262 = smul.u32 9, %s20
      %s263 = ssub.s32 10, %s262
      %p264 = scmp.lt.s32.totalorder %s263, 9
      %s265 = scalar_select %p264, %s263, 9
      %s266 = smul.u32 64, %s265
      %p267 = scmp.lt.s32.totalorder %s19, 1
      %s268 = scalar_select %p267, %s19, 1
      %p269 = scmp.lt.s32.totalorder %s262, 9
      %s270 = scalar_select %p269, %s262, 9
      %s271 = smul.addr %s268, 10
      %s272 = sadd.s32 %s270, %s271
      %s273 = smul.addr %s272, 4
      %s274 = scalar_lea.vmem %s0, %s273
      %s275 = smul.u32 9, %s20
      %s276 = ssub.s32 10, %s275
      %p277 = scmp.lt.s32.totalorder %s276, 9
      %s278 = scalar_select %p277, %s276, 9
      %s279 = smul.u32 64, %s278
      %s280 = sadd.s32 %s20, 1
      %s281 = smul.u32 %s280, 9
      %p282 = scmp.lt.s32.totalorder %s19, 1
      %s283 = scalar_select %p282, %s19, 1
      %p284 = scmp.lt.s32.totalorder %s281, 9
      %s285 = scalar_select %p284, %s281, 9
      %s286 = smul.addr %s283, 10
      %s287 = sadd.s32 %s285, %s286
      %s288 = smul.addr %s287, 4
      %s289 = scalar_lea.vmem %s1, %s288
      %s290 = sadd.s32 %s20, 1
      %s291 = smul.u32 %s290, 9
      %s292 = smul.u32 9, %s20
      %p293 = scmp.lt.s32.totalorder %s19, 1
      %s294 = scalar_select %p293, %s19, 1
      %p295 = scmp.lt.s32.totalorder %s292, 8
      %s296 = scalar_select %p295, %s292, 8
      %s297 = smul.addr %s294, 9
      %s298 = sadd.s32 %s296, %s297
      %s299 = smul.addr %s298, 8
      %s300 = scalar_lea.vmem %s4, %s299
      %s301 = smul.u32 9, %s20
      %v302 = vld [vmem:[%s274] sm:$0xff]
      %v303 = vld [vmem:[%s274 + $0x8] sm:$0xff]
      %v304 = vld [vmem:[%s274 + $0x10] sm:$0xff]
      %v305 = vld [vmem:[%s274 + $0x18] sm:$0xff]
      %v306 = vld [vmem:[%s274 + $0x20] sm:$0xf]
      %v307 = vld [vmem:[%s289] sm:$0xf]
      %v313 = vcombine.high %v302, %v302
      %v314 = vcombine.high %v303, %v303
      %v315 = vcombine.high %v304, %v304
      %v316 = vcombine.high %v305, %v305
      %v322 = vrot.slane %v302, 4
      %v323 = vrot.slane %v313, 4
      %v324 = vrot.slane %v303, 4
      %v325 = vrot.slane %v314, 4
      %v326 = vrot.slane %v304, 4
      %v327 = vrot.slane %v315, 4
      %v328 = vrot.slane %v305, 4
      %v329 = vrot.slane %v316, 4
      %v330 = vrot.slane %v306, 4
      %v331 = vrot.slane %v307, 4
      %332 = vrot.lane.b32.xlu0 %v322, 127
      %v333 = vpop.permute.xlu0 %332
      %334 = vrot.lane.b32.xlu0 %v323, 127
      %v335 = vpop.permute.xlu0 %334
      %336 = vrot.lane.b32.xlu0 %v324, 127
      %v337 = vpop.permute.xlu0 %336
      %338 = vrot.lane.b32.xlu0 %v325, 127
      %v339 = vpop.permute.xlu0 %338
      %340 = vrot.lane.b32.xlu0 %v326, 127
      %v341 = vpop.permute.xlu0 %340
      %342 = vrot.lane.b32.xlu0 %v327, 127
      %v343 = vpop.permute.xlu0 %342
      %344 = vrot.lane.b32.xlu0 %v328, 127
      %v345 = vpop.permute.xlu0 %344
      %346 = vrot.lane.b32.xlu0 %v329, 127
      %v347 = vpop.permute.xlu0 %346
      %348 = vrot.lane.b32.xlu0 %v330, 127
      %v349 = vpop.permute.xlu0 %348
      %350 = vrot.lane.b32.xlu0 %v331, 127
      %v351 = vpop.permute.xlu0 %350
      %vm352 = vcmask 1039360
      %v353 = vsel %vm352, %v333, %v335
      %v354 = vsel %vm352, %v335, %v337
      %v355 = vsel %vm352, %v337, %v339
      %v356 = vsel %vm352, %v339, %v341
      %v357 = vsel %vm352, %v341, %v343
      %v358 = vsel %vm352, %v343, %v345
      %v359 = vsel %vm352, %v345, %v347
      %v360 = vsel %vm352, %v347, %v349
      %v361 = vsel %vm352, %v349, %v351
      %371 = vrot.lane.b32.xlu0 %v302, 126
      %v372 = vpop.permute.xlu0 %371
      %373 = vrot.lane.b32.xlu0 %v313, 126
      %v374 = vpop.permute.xlu0 %373
      %375 = vrot.lane.b32.xlu0 %v303, 126
      %v376 = vpop.permute.xlu0 %375
      %377 = vrot.lane.b32.xlu0 %v314, 126
      %v378 = vpop.permute.xlu0 %377
      %379 = vrot.lane.b32.xlu0 %v304, 126
      %v380 = vpop.permute.xlu0 %379
      %381 = vrot.lane.b32.xlu0 %v315, 126
      %v382 = vpop.permute.xlu0 %381
      %383 = vrot.lane.b32.xlu0 %v305, 126
      %v384 = vpop.permute.xlu0 %383
      %385 = vrot.lane.b32.xlu0 %v316, 126
      %v386 = vpop.permute.xlu0 %385
      %387 = vrot.lane.b32.xlu0 %v306, 126
      %v388 = vpop.permute.xlu0 %387
      %389 = vrot.lane.b32.xlu0 %v307, 126
      %v390 = vpop.permute.xlu0 %389
      %vm391 = vcmask 1031168
      %v392 = vsel %vm391, %v372, %v374
      %v393 = vsel %vm391, %v374, %v376
      %v394 = vsel %vm391, %v376, %v378
      %v395 = vsel %vm391, %v378, %v380
      %v396 = vsel %vm391, %v380, %v382
      %v397 = vsel %vm391, %v382, %v384
      %v398 = vsel %vm391, %v384, %v386
      %v399 = vsel %vm391, %v386, %v388
      %v400 = vsel %vm391, %v388, %v390
      %410 = vrot.lane.b32.xlu0 %v322, 94
      %v411 = vpop.permute.xlu0 %410
      %412 = vrot.lane.b32.xlu0 %v323, 94
      %v413 = vpop.permute.xlu0 %412
      %414 = vrot.lane.b32.xlu0 %v324, 94
      %v415 = vpop.permute.xlu0 %414
      %416 = vrot.lane.b32.xlu0 %v325, 94
      %v417 = vpop.permute.xlu0 %416
      %418 = vrot.lane.b32.xlu0 %v326, 94
      %v419 = vpop.permute.xlu0 %418
      %420 = vrot.lane.b32.xlu0 %v327, 94
      %v421 = vpop.permute.xlu0 %420
      %422 = vrot.lane.b32.xlu0 %v328, 94
      %v423 = vpop.permute.xlu0 %422
      %424 = vrot.lane.b32.xlu0 %v329, 94
      %v425 = vpop.permute.xlu0 %424
      %426 = vrot.lane.b32.xlu0 %v330, 94
      %v427 = vpop.permute.xlu0 %426
      %428 = vrot.lane.b32.xlu0 %v331, 94
      %v429 = vpop.permute.xlu0 %428
      %vm430 = vcmask 769024
      %v431 = vsel %vm430, %v411, %v413
      %v432 = vsel %vm430, %v413, %v415
      %v433 = vsel %vm430, %v415, %v417
      %v434 = vsel %vm430, %v417, %v419
      %v435 = vsel %vm430, %v419, %v421
      %v436 = vsel %vm430, %v421, %v423
      %v437 = vsel %vm430, %v423, %v425
      %v438 = vsel %vm430, %v425, %v427
      %v439 = vsel %vm430, %v427, %v429
      %449 = vrot.lane.b32.xlu0 %v302, 93
      %v450 = vpop.permute.xlu0 %449
      %451 = vrot.lane.b32.xlu0 %v313, 93
      %v452 = vpop.permute.xlu0 %451
      %453 = vrot.lane.b32.xlu0 %v303, 93
      %v454 = vpop.permute.xlu0 %453
      %455 = vrot.lane.b32.xlu0 %v314, 93
      %v456 = vpop.permute.xlu0 %455
      %457 = vrot.lane.b32.xlu0 %v304, 93
      %v458 = vpop.permute.xlu0 %457
      %459 = vrot.lane.b32.xlu0 %v315, 93
      %v460 = vpop.permute.xlu0 %459
      %461 = vrot.lane.b32.xlu0 %v305, 93
      %v462 = vpop.permute.xlu0 %461
      %463 = vrot.lane.b32.xlu0 %v316, 93
      %v464 = vpop.permute.xlu0 %463
      %465 = vrot.lane.b32.xlu0 %v306, 93
      %v466 = vpop.permute.xlu0 %465
      %467 = vrot.lane.b32.xlu0 %v307, 93
      %v468 = vpop.permute.xlu0 %467
      %vm469 = vcmask 760832
      %v470 = vsel %vm469, %v450, %v452
      %v471 = vsel %vm469, %v452, %v454
      %v472 = vsel %vm469, %v454, %v456
      %v473 = vsel %vm469, %v456, %v458
      %v474 = vsel %vm469, %v458, %v460
      %v475 = vsel %vm469, %v460, %v462
      %v476 = vsel %vm469, %v462, %v464
      %v477 = vsel %vm469, %v464, %v466
      %v478 = vsel %vm469, %v466, %v468
      %488 = vrot.lane.b32.xlu0 %v322, 92
      %v489 = vpop.permute.xlu0 %488
      %490 = vrot.lane.b32.xlu0 %v323, 92
      %v491 = vpop.permute.xlu0 %490
      %492 = vrot.lane.b32.xlu0 %v324, 92
      %v493 = vpop.permute.xlu0 %492
      %494 = vrot.lane.b32.xlu0 %v325, 92
      %v495 = vpop.permute.xlu0 %494
      %496 = vrot.lane.b32.xlu0 %v326, 92
      %v497 = vpop.permute.xlu0 %496
      %498 = vrot.lane.b32.xlu0 %v327, 92
      %v499 = vpop.permute.xlu0 %498
      %500 = vrot.lane.b32.xlu0 %v328, 92
      %v501 = vpop.permute.xlu0 %500
      %502 = vrot.lane.b32.xlu0 %v329, 92
      %v503 = vpop.permute.xlu0 %502
      %504 = vrot.lane.b32.xlu0 %v330, 92
      %v505 = vpop.permute.xlu0 %504
      %506 = vrot.lane.b32.xlu0 %v331, 92
      %v507 = vpop.permute.xlu0 %506
      %vm508 = vcmask 752640
      %v509 = vsel %vm508, %v489, %v491
      %v510 = vsel %vm508, %v491, %v493
      %v511 = vsel %vm508, %v493, %v495
      %v512 = vsel %vm508, %v495, %v497
      %v513 = vsel %vm508, %v497, %v499
      %v514 = vsel %vm508, %v499, %v501
      %v515 = vsel %vm508, %v501, %v503
      %v516 = vsel %vm508, %v503, %v505
      %v517 = vsel %vm508, %v505, %v507
      %527 = vrot.lane.b32.xlu0 %v302, 60
      %v528 = vpop.permute.xlu0 %527
      %529 = vrot.lane.b32.xlu0 %v313, 60
      %v530 = vpop.permute.xlu0 %529
      %531 = vrot.lane.b32.xlu0 %v303, 60
      %v532 = vpop.permute.xlu0 %531
      %533 = vrot.lane.b32.xlu0 %v314, 60
      %v534 = vpop.permute.xlu0 %533
      %535 = vrot.lane.b32.xlu0 %v304, 60
      %v536 = vpop.permute.xlu0 %535
      %537 = vrot.lane.b32.xlu0 %v315, 60
      %v538 = vpop.permute.xlu0 %537
      %539 = vrot.lane.b32.xlu0 %v305, 60
      %v540 = vpop.permute.xlu0 %539
      %541 = vrot.lane.b32.xlu0 %v316, 60
      %v542 = vpop.permute.xlu0 %541
      %543 = vrot.lane.b32.xlu0 %v306, 60
      %v544 = vpop.permute.xlu0 %543
      %545 = vrot.lane.b32.xlu0 %v307, 60
      %v546 = vpop.permute.xlu0 %545
      %vm547 = vcmask 490496
      %v548 = vsel %vm547, %v528, %v530
      %v549 = vsel %vm547, %v530, %v532
      %v550 = vsel %vm547, %v532, %v534
      %v551 = vsel %vm547, %v534, %v536
      %v552 = vsel %vm547, %v536, %v538
      %v553 = vsel %vm547, %v538, %v540
      %v554 = vsel %vm547, %v540, %v542
      %v555 = vsel %vm547, %v542, %v544
      %v556 = vsel %vm547, %v544, %v546
      %566 = vrot.lane.b32.xlu0 %v322, 59
      %v567 = vpop.permute.xlu0 %566
      %568 = vrot.lane.b32.xlu0 %v323, 59
      %v569 = vpop.permute.xlu0 %568
      %570 = vrot.lane.b32.xlu0 %v324, 59
      %v571 = vpop.permute.xlu0 %570
      %572 = vrot.lane.b32.xlu0 %v325, 59
      %v573 = vpop.permute.xlu0 %572
      %574 = vrot.lane.b32.xlu0 %v326, 59
      %v575 = vpop.permute.xlu0 %574
      %576 = vrot.lane.b32.xlu0 %v327, 59
      %v577 = vpop.permute.xlu0 %576
      %578 = vrot.lane.b32.xlu0 %v328, 59
      %v579 = vpop.permute.xlu0 %578
      %580 = vrot.lane.b32.xlu0 %v329, 59
      %v581 = vpop.permute.xlu0 %580
      %582 = vrot.lane.b32.xlu0 %v330, 59
      %v583 = vpop.permute.xlu0 %582
      %584 = vrot.lane.b32.xlu0 %v331, 59
      %v585 = vpop.permute.xlu0 %584
      %vm586 = vcmask 482304
      %v587 = vsel %vm586, %v567, %v569
      %v588 = vsel %vm586, %v569, %v571
      %v589 = vsel %vm586, %v571, %v573
      %v590 = vsel %vm586, %v573, %v575
      %v591 = vsel %vm586, %v575, %v577
      %v592 = vsel %vm586, %v577, %v579
      %v593 = vsel %vm586, %v579, %v581
      %v594 = vsel %vm586, %v581, %v583
      %v595 = vsel %vm586, %v583, %v585
      %605 = vrot.lane.b32.xlu0 %v302, 58
      %v606 = vpop.permute.xlu0 %605
      %607 = vrot.lane.b32.xlu0 %v313, 58
      %v608 = vpop.permute.xlu0 %607
      %609 = vrot.lane.b32.xlu0 %v303, 58
      %v610 = vpop.permute.xlu0 %609
      %611 = vrot.lane.b32.xlu0 %v314, 58
      %v612 = vpop.permute.xlu0 %611
      %613 = vrot.lane.b32.xlu0 %v304, 58
      %v614 = vpop.permute.xlu0 %613
      %615 = vrot.lane.b32.xlu0 %v315, 58
      %v616 = vpop.permute.xlu0 %615
      %617 = vrot.lane.b32.xlu0 %v305, 58
      %v618 = vpop.permute.xlu0 %617
      %619 = vrot.lane.b32.xlu0 %v316, 58
      %v620 = vpop.permute.xlu0 %619
      %621 = vrot.lane.b32.xlu0 %v306, 58
      %v622 = vpop.permute.xlu0 %621
      %623 = vrot.lane.b32.xlu0 %v307, 58
      %v624 = vpop.permute.xlu0 %623
      %vm625 = vcmask 474112
      %v626 = vsel %vm625, %v606, %v608
      %v627 = vsel %vm625, %v608, %v610
      %v628 = vsel %vm625, %v610, %v612
      %v629 = vsel %vm625, %v612, %v614
      %v630 = vsel %vm625, %v614, %v616
      %v631 = vsel %vm625, %v616, %v618
      %v632 = vsel %vm625, %v618, %v620
      %v633 = vsel %vm625, %v620, %v622
      %v634 = vsel %vm625, %v622, %v624
      %vm635 = vcmask 1043456
      %v636 = vsel %vm635, %v302, %v353
      %v637 = vsel %vm635, %v313, %v354
      %v638 = vsel %vm635, %v303, %v355
      %v639 = vsel %vm635, %v314, %v356
      %v640 = vsel %vm635, %v304, %v357
      %v641 = vsel %vm635, %v315, %v358
      %v642 = vsel %vm635, %v305, %v359
      %v643 = vsel %vm635, %v316, %v360
      %v644 = vsel %vm635, %v306, %v361
      %v645 = vsel %vm635, %v392, %v431
      %v646 = vsel %vm635, %v393, %v432
      %v647 = vsel %vm635, %v394, %v433
      %v648 = vsel %vm635, %v395, %v434
      %v649 = vsel %vm635, %v396, %v435
      %v650 = vsel %vm635, %v397, %v436
      %v651 = vsel %vm635, %v398, %v437
      %v652 = vsel %vm635, %v399, %v438
      %v653 = vsel %vm635, %v400, %v439
      %v654 = vsel %vm635, %v470, %v509
      %v655 = vsel %vm635, %v471, %v510
      %v656 = vsel %vm635, %v472, %v511
      %v657 = vsel %vm635, %v473, %v512
      %v658 = vsel %vm635, %v474, %v513
      %v659 = vsel %vm635, %v475, %v514
      %v660 = vsel %vm635, %v476, %v515
      %v661 = vsel %vm635, %v477, %v516
      %v662 = vsel %vm635, %v478, %v517
      %v663 = vsel %vm635, %v548, %v587
      %v664 = vsel %vm635, %v549, %v588
      %v665 = vsel %vm635, %v550, %v589
      %v666 = vsel %vm635, %v551, %v590
      %v667 = vsel %vm635, %v552, %v591
      %v668 = vsel %vm635, %v553, %v592
      %v669 = vsel %vm635, %v554, %v593
      %v670 = vsel %vm635, %v555, %v594
      %v671 = vsel %vm635, %v556, %v595
      %v672 = vld [vmem:[%s2] sm:$0xff]
      %v673 = vld [vmem:[%s2 + $0x8] sm:$0xff]
      %v674 = vld [vmem:[%s3] sm:$0xff]
      %v675 = vld [vmem:[%s3 + $0x8] sm:$0xff]
      %677 = vset.pattern.permute.xlu0 0
      %678 = vperm.xlu0 %677, %v674
      %v679 = vpop.permute.xlu0 %678
      %682 = vset.pattern.permute.xlu0 0
      %683 = vperm.xlu0 %682, %v675
      %v684 = vpop.permute.xlu0 %683
      %vm686 = vcmask 293888
      %v688 = vsel %vm686, %v672, 0
      %v691 = vsel %vm686, %v673, 0
      %v693 = vsel %vm635, %v626, 0
      %v695 = vsel %vm635, %v627, 0
      %v697 = vsel %vm635, %v628, 0
      %v699 = vsel %vm635, %v629, 0
      %v701 = vsel %vm635, %v630, 0
      %v703 = vsel %vm635, %v631, 0
      %v705 = vsel %vm635, %v632, 0
      %v707 = vsel %vm635, %v633, 0
      %v709 = vsel %vm635, %v634, 0
      %711 = vmatprep.subr.mxu0 %v637
      %712 = vmatpush1.msra.mxu0 %v636
      %713 = vmatprep.subr.mxu0 %v646
      %714 = vmatpush1.msra.mxu0 %v645
      %715 = vmatprep.subr.mxu0 %v655
      %716 = vmatpush1.msra.mxu0 %v654
      %717 = vmatprep.subr.mxu0 %v664
      %718 = vmatpush1.msra.mxu0 %v663
      %719 = vmatprep.subr.mxu0 %v695
      %720 = vmatpush1.msra.mxu0 %v693
      %721 = vmatprep.subr.mxu0 0.0
      %722 = vmatpush1.msra.mxu0 0.0
      %723 = vmatprep.subr.mxu0 0.0
      %724 = vmatpush1.msra.mxu0 0.0
      %725 = vmatprep.subr.mxu0 0.0
      %726 = vmatpush1.msra.mxu0 0.0
      %727 = vmatprep.subr.mxu0 0.0
      %728 = vmatpush1.msra.mxu0 0.0
      %729 = vmatprep.subr.mxu0 0.0
      %730 = vmatpush1.msra.mxu0 0.0
      %731 = vmatprep.subr.mxu0 0.0
      %732 = vmatpush1.msra.mxu0 0.0
      %733 = vmatprep.subr.mxu0 0.0
      %734 = vmatpush1.msra.mxu0 0.0
      %735 = vmatprep.subr.mxu0 0.0
      %736 = vmatpush1.msra.mxu0 0.0
      %737 = vmatprep.subr.mxu0 0.0
      %738 = vmatpush1.msra.mxu0 0.0
      %739 = vmatprep.subr.mxu0 0.0
      %740 = vmatpush1.msra.mxu0 0.0
      %741 = vmatprep.subr.mxu0 0.0
      %742 = vmatpush1.msra.mxu0 0.0
      %743 = vmatprep.subr.mxu0 0.0
      %744 = vmatpush1.msra.mxu0 0.0
      %745 = vmatprep.subr.mxu0 0.0
      %746 = vmatpush1.msra.mxu0 0.0
      %747 = vmatprep.subr.mxu0 0.0
      %748 = vmatpush1.msra.mxu0 0.0
      %749 = vmatprep.subr.mxu0 0.0
      %750 = vmatpush1.msra.mxu0 0.0
      %751 = vmatprep.subr.mxu0 0.0
      %752 = vmatpush1.msra.mxu0 0.0
      %753 = vmatprep.subr.mxu0 0.0
      %754 = vmatpush1.msra.mxu0 0.0
      %755 = vmatprep.subr.mxu0 0.0
      %756 = vmatpush1.msra.mxu0 0.0
      %757 = vmatprep.subr.mxu0 0.0
      %758 = vmatpush1.msra.mxu0 0.0
      %759 = vmatprep.subr.mxu0 0.0
      %760 = vmatpush1.msra.mxu0 0.0
      %761 = vmatprep.subr.mxu0 0.0
      %762 = vmatpush1.msra.mxu0 0.0
      %763 = vmatprep.subr.mxu0 0.0
      %764 = vmatpush1.msra.mxu0 0.0
      %765 = vmatprep.subr.mxu0 0.0
      %766 = vmatpush1.msra.mxu0 0.0
      %767 = vmatprep.subr.mxu0 0.0
      %768 = vmatpush1.msra.mxu0 0.0
      %769 = vmatprep.subr.mxu0 0.0
      %770 = vmatpush1.msra.mxu0 0.0
      %771 = vmatprep.subr.mxu0 0.0
      %772 = vmatpush1.msra.mxu0 0.0
      %773 = vmatprep.subr.mxu0 0.0
      %774 = vmatpush1.msra.mxu0 0.0
      %775 = vmatprep.mubr.f32.mxu0 0.0
      %776 = vmatmul.mubr.f32.gmra.mrb[0].mxu0 %v688
      %v777 = vpop.f32.mrb[0].mxu0
      %v778 = vadd.f32 %v679, %v777
      %v779 = vpop.f32.mrb[0].mxu0
      %v780 = vadd.f32 %v679, %v779
      %781 = vmatprep.mubr.f32.mxu0 0.0
      %782 = vmatmul.mubr.f32.gmra.mrb[0].mxu0 %v691
      %v783 = vpop.f32.mrb[0].mxu0
      %v784 = vadd.f32 %v684, %v783
      %v785 = vpop.f32.mrb[0].mxu0
      %v786 = vadd.f32 %v684, %v785
      %787 = vdwg.mxu0
      %788 = vmatprep.subr.mxu0 %v639
      %789 = vmatpush1.msra.mxu0 %v638
      %790 = vmatprep.subr.mxu0 %v648
      %791 = vmatpush1.msra.mxu0 %v647
      %792 = vmatprep.subr.mxu0 %v657
      %793 = vmatpush1.msra.mxu0 %v656
      %794 = vmatprep.subr.mxu0 %v666
      %795 = vmatpush1.msra.mxu0 %v665
      %796 = vmatprep.subr.mxu0 %v699
      %797 = vmatpush1.msra.mxu0 %v697
      %798 = vmatprep.subr.mxu0 0.0
      %799 = vmatpush1.msra.mxu0 0.0
      %800 = vmatprep.subr.mxu0 0.0
      %801 = vmatpush1.msra.mxu0 0.0
      %802 = vmatprep.subr.mxu0 0.0
      %803 = vmatpush1.msra.mxu0 0.0
      %804 = vmatprep.subr.mxu0 0.0
      %805 = vmatpush1.msra.mxu0 0.0
      %806 = vmatprep.subr.mxu0 0.0
      %807 = vmatpush1.msra.mxu0 0.0
      %808 = vmatprep.subr.mxu0 0.0
      %809 = vmatpush1.msra.mxu0 0.0
      %810 = vmatprep.subr.mxu0 0.0
      %811 = vmatpush1.msra.mxu0 0.0
      %812 = vmatprep.subr.mxu0 0.0
      %813 = vmatpush1.msra.mxu0 0.0
      %814 = vmatprep.subr.mxu0 0.0
      %815 = vmatpush1.msra.mxu0 0.0
      %816 = vmatprep.subr.mxu0 0.0
      %817 = vmatpush1.msra.mxu0 0.0
      %818 = vmatprep.subr.mxu0 0.0
      %819 = vmatpush1.msra.mxu0 0.0
      %820 = vmatprep.subr.mxu0 0.0
      %821 = vmatpush1.msra.mxu0 0.0
      %822 = vmatprep.subr.mxu0 0.0
      %823 = vmatpush1.msra.mxu0 0.0
      %824 = vmatprep.subr.mxu0 0.0
      %825 = vmatpush1.msra.mxu0 0.0
      %826 = vmatprep.subr.mxu0 0.0
      %827 = vmatpush1.msra.mxu0 0.0
      %828 = vmatprep.subr.mxu0 0.0
      %829 = vmatpush1.msra.mxu0 0.0
      %830 = vmatprep.subr.mxu0 0.0
      %831 = vmatpush1.msra.mxu0 0.0
      %832 = vmatprep.subr.mxu0 0.0
      %833 = vmatpush1.msra.mxu0 0.0
      %834 = vmatprep.subr.mxu0 0.0
      %835 = vmatpush1.msra.mxu0 0.0
      %836 = vmatprep.subr.mxu0 0.0
      %837 = vmatpush1.msra.mxu0 0.0
      %838 = vmatprep.subr.mxu0 0.0
      %839 = vmatpush1.msra.mxu0 0.0
      %840 = vmatprep.subr.mxu0 0.0
      %841 = vmatpush1.msra.mxu0 0.0
      %842 = vmatprep.subr.mxu0 0.0
      %843 = vmatpush1.msra.mxu0 0.0
      %844 = vmatprep.subr.mxu0 0.0
      %845 = vmatpush1.msra.mxu0 0.0
      %846 = vmatprep.subr.mxu0 0.0
      %847 = vmatpush1.msra.mxu0 0.0
      %848 = vmatprep.subr.mxu0 0.0
      %849 = vmatpush1.msra.mxu0 0.0
      %850 = vmatprep.subr.mxu0 0.0
      %851 = vmatpush1.msra.mxu0 0.0
      %852 = vmatprep.mubr.f32.mxu0 0.0
      %853 = vmatmul.mubr.f32.gmra.mrb[0].mxu0 %v688
      %v854 = vpop.f32.mrb[0].mxu0
      %v855 = vadd.f32 %v679, %v854
      %v856 = vpop.f32.mrb[0].mxu0
      %v857 = vadd.f32 %v679, %v856
      %858 = vmatprep.mubr.f32.mxu0 0.0
      %859 = vmatmul.mubr.f32.gmra.mrb[0].mxu0 %v691
      %v860 = vpop.f32.mrb[0].mxu0
      %v861 = vadd.f32 %v684, %v860
      %v862 = vpop.f32.mrb[0].mxu0
      %v863 = vadd.f32 %v684, %v862
      %864 = vdwg.mxu0
      %865 = vmatprep.subr.mxu0 %v641
      %866 = vmatpush1.msra.mxu0 %v640
      %867 = vmatprep.subr.mxu0 %v650
      %868 = vmatpush1.msra.mxu0 %v649
      %869 = vmatprep.subr.mxu0 %v659
      %870 = vmatpush1.msra.mxu0 %v658
      %871 = vmatprep.subr.mxu0 %v668
      %872 = vmatpush1.msra.mxu0 %v667
      %873 = vmatprep.subr.mxu0 %v703
      %874 = vmatpush1.msra.mxu0 %v701
      %875 = vmatprep.subr.mxu0 0.0
      %876 = vmatpush1.msra.mxu0 0.0
      %877 = vmatprep.subr.mxu0 0.0
      %878 = vmatpush1.msra.mxu0 0.0
      %879 = vmatprep.subr.mxu0 0.0
      %880 = vmatpush1.msra.mxu0 0.0
      %881 = vmatprep.subr.mxu0 0.0
      %882 = vmatpush1.msra.mxu0 0.0
      %883 = vmatprep.subr.mxu0 0.0
      %884 = vmatpush1.msra.mxu0 0.0
      %885 = vmatprep.subr.mxu0 0.0
      %886 = vmatpush1.msra.mxu0 0.0
      %887 = vmatprep.subr.mxu0 0.0
      %888 = vmatpush1.msra.mxu0 0.0
      %889 = vmatprep.subr.mxu0 0.0
      %890 = vmatpush1.msra.mxu0 0.0
      %891 = vmatprep.subr.mxu0 0.0
      %892 = vmatpush1.msra.mxu0 0.0
      %893 = vmatprep.subr.mxu0 0.0
      %894 = vmatpush1.msra.mxu0 0.0
      %895 = vmatprep.subr.mxu0 0.0
      %896 = vmatpush1.msra.mxu0 0.0
      %897 = vmatprep.subr.mxu0 0.0
      %898 = vmatpush1.msra.mxu0 0.0
      %899 = vmatprep.subr.mxu0 0.0
      %900 = vmatpush1.msra.mxu0 0.0
      %901 = vmatprep.subr.mxu0 0.0
      %902 = vmatpush1.msra.mxu0 0.0
      %903 = vmatprep.subr.mxu0 0.0
      %904 = vmatpush1.msra.mxu0 0.0
      %905 = vmatprep.subr.mxu0 0.0
      %906 = vmatpush1.msra.mxu0 0.0
      %907 = vmatprep.subr.mxu0 0.0
      %908 = vmatpush1.msra.mxu0 0.0
      %909 = vmatprep.subr.mxu0 0.0
      %910 = vmatpush1.msra.mxu0 0.0
      %911 = vmatprep.subr.mxu0 0.0
      %912 = vmatpush1.msra.mxu0 0.0
      %913 = vmatprep.subr.mxu0 0.0
      %914 = vmatpush1.msra.mxu0 0.0
      %915 = vmatprep.subr.mxu0 0.0
      %916 = vmatpush1.msra.mxu0 0.0
      %917 = vmatprep.subr.mxu0 0.0
      %918 = vmatpush1.msra.mxu0 0.0
      %919 = vmatprep.subr.mxu0 0.0
      %920 = vmatpush1.msra.mxu0 0.0
      %921 = vmatprep.subr.mxu0 0.0
      %922 = vmatpush1.msra.mxu0 0.0
      %923 = vmatprep.subr.mxu0 0.0
      %924 = vmatpush1.msra.mxu0 0.0
      %925 = vmatprep.subr.mxu0 0.0
      %926 = vmatpush1.msra.mxu0 0.0
      %927 = vmatprep.subr.mxu0 0.0
      %928 = vmatpush1.msra.mxu0 0.0
      %929 = vmatprep.mubr.f32.mxu0 0.0
      %930 = vmatmul.mubr.f32.gmra.mrb[0].mxu0 %v688
      %v931 = vpop.f32.mrb[0].mxu0
      %v932 = vadd.f32 %v679, %v931
      %v933 = vpop.f32.mrb[0].mxu0
      %v934 = vadd.f32 %v679, %v933
      %935 = vmatprep.mubr.f32.mxu0 0.0
      %936 = vmatmul.mubr.f32.gmra.mrb[0].mxu0 %v691
      %v937 = vpop.f32.mrb[0].mxu0
      %v938 = vadd.f32 %v684, %v937
      %v939 = vpop.f32.mrb[0].mxu0
      %v940 = vadd.f32 %v684, %v939
      %941 = vdwg.mxu0
      %942 = vmatprep.subr.mxu0 %v643
      %943 = vmatpush1.msra.mxu0 %v642
      %944 = vmatprep.subr.mxu0 %v652
      %945 = vmatpush1.msra.mxu0 %v651
      %946 = vmatprep.subr.mxu0 %v661
      %947 = vmatpush1.msra.mxu0 %v660
      %948 = vmatprep.subr.mxu0 %v670
      %949 = vmatpush1.msra.mxu0 %v669
      %950 = vmatprep.subr.mxu0 %v707
      %951 = vmatpush1.msra.mxu0 %v705
      %952 = vmatprep.subr.mxu0 0.0
      %953 = vmatpush1.msra.mxu0 0.0
      %954 = vmatprep.subr.mxu0 0.0
      %955 = vmatpush1.msra.mxu0 0.0
      %956 = vmatprep.subr.mxu0 0.0
      %957 = vmatpush1.msra.mxu0 0.0
      %958 = vmatprep.subr.mxu0 0.0
      %959 = vmatpush1.msra.mxu0 0.0
      %960 = vmatprep.subr.mxu0 0.0
      %961 = vmatpush1.msra.mxu0 0.0
      %962 = vmatprep.subr.mxu0 0.0
      %963 = vmatpush1.msra.mxu0 0.0
      %964 = vmatprep.subr.mxu0 0.0
      %965 = vmatpush1.msra.mxu0 0.0
      %966 = vmatprep.subr.mxu0 0.0
      %967 = vmatpush1.msra.mxu0 0.0
      %968 = vmatprep.subr.mxu0 0.0
      %969 = vmatpush1.msra.mxu0 0.0
      %970 = vmatprep.subr.mxu0 0.0
      %971 = vmatpush1.msra.mxu0 0.0
      %972 = vmatprep.subr.mxu0 0.0
      %973 = vmatpush1.msra.mxu0 0.0
      %974 = vmatprep.subr.mxu0 0.0
      %975 = vmatpush1.msra.mxu0 0.0
      %976 = vmatprep.subr.mxu0 0.0
      %977 = vmatpush1.msra.mxu0 0.0
      %978 = vmatprep.subr.mxu0 0.0
      %979 = vmatpush1.msra.mxu0 0.0
      %980 = vmatprep.subr.mxu0 0.0
      %981 = vmatpush1.msra.mxu0 0.0
      %982 = vmatprep.subr.mxu0 0.0
      %983 = vmatpush1.msra.mxu0 0.0
      %984 = vmatprep.subr.mxu0 0.0
      %985 = vmatpush1.msra.mxu0 0.0
      %986 = vmatprep.subr.mxu0 0.0
      %987 = vmatpush1.msra.mxu0 0.0
      %988 = vmatprep.subr.mxu0 0.0
      %989 = vmatpush1.msra.mxu0 0.0
      %990 = vmatprep.subr.mxu0 0.0
      %991 = vmatpush1.msra.mxu0 0.0
      %992 = vmatprep.subr.mxu0 0.0
      %993 = vmatpush1.msra.mxu0 0.0
      %994 = vmatprep.subr.mxu0 0.0
      %995 = vmatpush1.msra.mxu0 0.0
      %996 = vmatprep.subr.mxu0 0.0
      %997 = vmatpush1.msra.mxu0 0.0
      %998 = vmatprep.subr.mxu0 0.0
      %999 = vmatpush1.msra.mxu0 0.0
      %1000 = vmatprep.subr.mxu0 0.0
      %1001 = vmatpush1.msra.mxu0 0.0
      %1002 = vmatprep.subr.mxu0 0.0
      %1003 = vmatpush1.msra.mxu0 0.0
      %1004 = vmatprep.subr.mxu0 0.0
      %1005 = vmatpush1.msra.mxu0 0.0
      %1006 = vmatprep.mubr.f32.mxu0 0.0
      %1007 = vmatmul.mubr.f32.gmra.mrb[0].mxu0 %v688
      %v1008 = vpop.f32.mrb[0].mxu0
      %v1009 = vadd.f32 %v679, %v1008
      %v1010 = vpop.f32.mrb[0].mxu0
      %v1011 = vadd.f32 %v679, %v1010
      %1012 = vmatprep.mubr.f32.mxu0 0.0
      %1013 = vmatmul.mubr.f32.gmra.mrb[0].mxu0 %v691
      %v1014 = vpop.f32.mrb[0].mxu0
      %v1015 = vadd.f32 %v684, %v1014
      %v1016 = vpop.f32.mrb[0].mxu0
      %v1017 = vadd.f32 %v684, %v1016
      %1018 = vdwg.mxu0
      %1019 = vmatprep.subr.mxu0 0.0
      %1020 = vmatpush1.msra.mxu0 %v644
      %1021 = vmatprep.subr.mxu0 0.0
      %1022 = vmatpush1.msra.mxu0 %v653
      %1023 = vmatprep.subr.mxu0 0.0
      %1024 = vmatpush1.msra.mxu0 %v662
      %1025 = vmatprep.subr.mxu0 0.0
      %1026 = vmatpush1.msra.mxu0 %v671
      %1027 = vmatprep.subr.mxu0 0.0
      %1028 = vmatpush1.msra.mxu0 %v709
      %1029 = vmatprep.subr.mxu0 0.0
      %1030 = vmatpush1.msra.mxu0 0.0
      %1031 = vmatprep.subr.mxu0 0.0
      %1032 = vmatpush1.msra.mxu0 0.0
      %1033 = vmatprep.subr.mxu0 0.0
      %1034 = vmatpush1.msra.mxu0 0.0
      %1035 = vmatprep.subr.mxu0 0.0
      %1036 = vmatpush1.msra.mxu0 0.0
      %1037 = vmatprep.subr.mxu0 0.0
      %1038 = vmatpush1.msra.mxu0 0.0
      %1039 = vmatprep.subr.mxu0 0.0
      %1040 = vmatpush1.msra.mxu0 0.0
      %1041 = vmatprep.subr.mxu0 0.0
      %1042 = vmatpush1.msra.mxu0 0.0
      %1043 = vmatprep.subr.mxu0 0.0
      %1044 = vmatpush1.msra.mxu0 0.0
      %1045 = vmatprep.subr.mxu0 0.0
      %1046 = vmatpush1.msra.mxu0 0.0
      %1047 = vmatprep.subr.mxu0 0.0
      %1048 = vmatpush1.msra.mxu0 0.0
      %1049 = vmatprep.subr.mxu0 0.0
      %1050 = vmatpush1.msra.mxu0 0.0
      %1051 = vmatprep.subr.mxu0 0.0
      %1052 = vmatpush1.msra.mxu0 0.0
      %1053 = vmatprep.subr.mxu0 0.0
      %1054 = vmatpush1.msra.mxu0 0.0
      %1055 = vmatprep.subr.mxu0 0.0
      %1056 = vmatpush1.msra.mxu0 0.0
      %1057 = vmatprep.subr.mxu0 0.0
      %1058 = vmatpush1.msra.mxu0 0.0
      %1059 = vmatprep.subr.mxu0 0.0
      %1060 = vmatpush1.msra.mxu0 0.0
      %1061 = vmatprep.subr.mxu0 0.0
      %1062 = vmatpush1.msra.mxu0 0.0
      %1063 = vmatprep.subr.mxu0 0.0
      %1064 = vmatpush1.msra.mxu0 0.0
      %1065 = vmatprep.subr.mxu0 0.0
      %1066 = vmatpush1.msra.mxu0 0.0
      %1067 = vmatprep.subr.mxu0 0.0
      %1068 = vmatpush1.msra.mxu0 0.0
      %1069 = vmatprep.subr.mxu0 0.0
      %1070 = vmatpush1.msra.mxu0 0.0
      %1071 = vmatprep.subr.mxu0 0.0
      %1072 = vmatpush1.msra.mxu0 0.0
      %1073 = vmatprep.subr.mxu0 0.0
      %1074 = vmatpush1.msra.mxu0 0.0
      %1075 = vmatprep.subr.mxu0 0.0
      %1076 = vmatpush1.msra.mxu0 0.0
      %1077 = vmatprep.subr.mxu0 0.0
      %1078 = vmatpush1.msra.mxu0 0.0
      %1079 = vmatprep.subr.mxu0 0.0
      %1080 = vmatpush1.msra.mxu0 0.0
      %1081 = vmatprep.subr.mxu0 0.0
      %1082 = vmatpush1.msra.mxu0 0.0
      %1083 = vmatprep.mubr.f32.mxu0 0.0
      %1084 = vmatmul.mubr.f32.gmra.mrb[0].mxu0 %v688
      %v1085 = vpop.f32.mrb[0].mxu0
      %v1086 = vadd.f32 %v679, %v1085
      %v1087 = vpop.f32.mrb[0].mxu0
      %1088 = vmatprep.mubr.f32.mxu0 0.0
      %1089 = vmatmul.mubr.f32.gmra.mrb[0].mxu0 %v691
      %v1090 = vpop.f32.mrb[0].mxu0
      %v1091 = vadd.f32 %v684, %v1090
      %v1092 = vpop.f32.mrb[0].mxu0
      %1093 = vdwg.mxu0
      %v1094 = vxor.u32 %v784, 2147483648
      %v1095 = vxor.u32 %v786, 2147483648
      %v1096 = vxor.u32 %v861, 2147483648
      %v1097 = vxor.u32 %v863, 2147483648
      %v1098 = vxor.u32 %v938, 2147483648
      %v1099 = vxor.u32 %v940, 2147483648
      %v1100 = vxor.u32 %v1015, 2147483648
      %v1101 = vxor.u32 %v1017, 2147483648
      %v1102 = vxor.u32 %v1091, 2147483648
      %v1103 = vmul.f32 %v1094, 1.442695
      %v1104 = vpow.pop %v1103
      %v1105 = vmul.f32 %v1095, 1.442695
      %v1106 = vpow.pop %v1105
      %v1107 = vmul.f32 %v1096, 1.442695
      %v1108 = vpow.pop %v1107
      %v1109 = vmul.f32 %v1097, 1.442695
      %v1110 = vpow.pop %v1109
      %v1111 = vmul.f32 %v1098, 1.442695
      %v1112 = vpow.pop %v1111
      %v1113 = vmul.f32 %v1099, 1.442695
      %v1114 = vpow.pop %v1113
      %v1115 = vmul.f32 %v1100, 1.442695
      %v1116 = vpow.pop %v1115
      %v1117 = vmul.f32 %v1101, 1.442695
      %v1118 = vpow.pop %v1117
      %v1119 = vmul.f32 %v1102, 1.442695
      %v1120 = vpow.pop %v1119
      %v1121 = vadd.f32 %v1104, 1.0
      %v1122 = vadd.f32 %v1106, 1.0
      %v1123 = vadd.f32 %v1108, 1.0
      %v1124 = vadd.f32 %v1110, 1.0
      %v1125 = vadd.f32 %v1112, 1.0
      %v1126 = vadd.f32 %v1114, 1.0
      %v1127 = vadd.f32 %v1116, 1.0
      %v1128 = vadd.f32 %v1118, 1.0
      %v1129 = vadd.f32 %v1120, 1.0
      %v1130 = vrcp.pop %v1121
      %v1131 = vmul.f32 1.0, %v1130
      %v1132 = vrcp.pop %v1122
      %v1133 = vmul.f32 1.0, %v1132
      %v1134 = vrcp.pop %v1123
      %v1135 = vmul.f32 1.0, %v1134
      %v1136 = vrcp.pop %v1124
      %v1137 = vmul.f32 1.0, %v1136
      %v1138 = vrcp.pop %v1125
      %v1139 = vmul.f32 1.0, %v1138
      %v1140 = vrcp.pop %v1126
      %v1141 = vmul.f32 1.0, %v1140
      %v1142 = vrcp.pop %v1127
      %v1143 = vmul.f32 1.0, %v1142
      %v1144 = vrcp.pop %v1128
      %v1145 = vmul.f32 1.0, %v1144
      %v1146 = vrcp.pop %v1129
      %v1147 = vmul.f32 1.0, %v1146
      %v1148 = vmul.f32 %v778, %v1131
      %v1149 = vmul.f32 %v780, %v1133
      %v1150 = vmul.f32 %v855, %v1135
      %v1151 = vmul.f32 %v857, %v1137
      %v1152 = vmul.f32 %v932, %v1139
      %v1153 = vmul.f32 %v934, %v1141
      %v1154 = vmul.f32 %v1009, %v1143
      %v1155 = vmul.f32 %v1011, %v1145
      %v1156 = vmul.f32 %v1086, %v1147
      %1157 = vst [vmem:[%s300] sm:$0xff] %v1148
      %1158 = vst [vmem:[%s300 + $0x8] sm:$0xff] %v1149
      %1159 = vst [vmem:[%s300 + $0x10] sm:$0xff] %v1150
      %1160 = vst [vmem:[%s300 + $0x18] sm:$0xff] %v1151
      %1161 = vst [vmem:[%s300 + $0x20] sm:$0xff] %v1152
      %1162 = vst [vmem:[%s300 + $0x28] sm:$0xff] %v1153
      %1163 = vst [vmem:[%s300 + $0x30] sm:$0xff] %v1154
      %1164 = vst [vmem:[%s300 + $0x38] sm:$0xff] %v1155
      %1165 = vst [vmem:[%s300 + $0x40] sm:$0xff] %v1156
      %s1166 = smul.u32 9, %s20
      %p1167 = scmp.lt.s32.totalorder %s19, 1
      %s1168 = scalar_select %p1167, %s19, 1
      %p1169 = scmp.lt.s32.totalorder %s1166, 8
      %s1170 = scalar_select %p1169, %s1166, 8
      %s1171 = smul.addr %s1168, 9
      %s1172 = sadd.s32 %s1170, %s1171
      %s1173 = smul.addr %s1172, 8
      %s1174 = scalar_lea.vmem %s4, %s1173
      // Predicated region
      $region37: #{gated_conv_transpose2d.1} parent=35 // pred_check
        %p1175 = pneg %p149
      $region38: #{gated_conv_transpose2d.1} parent=35 // pred_check_branch
        %1177 = sbr.rel (%p1175) target = $region40
      $region39: #{gated_conv_transpose2d.1} parent=35 // pred_region
        %s1178 = smul.u32 9, %s20
      $region40: #{gated_conv_transpose2d.1} parent=35 // pred_fallthru
        _
    $region36: #{gated_conv_transpose2d.1} parent=5 // pred_fallthru
      _
    %p1179 = scmp.le.s32.totalorder 2, %s10
    // Predicated region
    $region41: #{gated_conv_transpose2d.1} parent=5 // pred_check
      %p1180 = pneg %p1179
    $region42: #{gated_conv_transpose2d.1} parent=5 // pred_check_branch
      %1182 = sbr.rel (%p1180) target = $region44
    $region43: #{gated_conv_transpose2d.1} parent=5 // pred_region
      %s1183 = ssub.s32 %s10, 2
      // Predicated region
      $region45: #{gated_conv_transpose2d.1} parent=43 // pred_check
        %p1184 = pneg %p155
      $region46: #{gated_conv_transpose2d.1} parent=43 // pred_check_branch
        %1186 = sbr.rel (%p1184) target = $region48
      $region47: #{gated_conv_transpose2d.1} parent=43 // pred_region
        %s1187 = smul.u32 9, %s22
        %p1188 = scmp.lt.s32.totalorder %s21, 1
        %s1189 = scalar_select %p1188, %s21, 1
        %p1190 = scmp.lt.s32.totalorder %s1187, 8
        %s1191 = scalar_select %p1190, %s1187, 8
        %s1192 = smul.addr %s1189, 9
        %s1193 = sadd.s32 %s1191, %s1192
        %s1194 = smul.addr %s1193, 8
        %s1195 = scalar_lea.vmem %s4, %s1194
      $region48: #{gated_conv_transpose2d.1} parent=43 // pred_fallthru
        _
    $region44: #{gated_conv_transpose2d.1} parent=5 // pred_fallthru
      _
  $region6: #{gated_conv_transpose2d.1} parent=0 // loop_footer
    %s14 = sadd.s32 1, %s10
  $region7: #{gated_conv_transpose2d.1} parent=0 // loop_footer_branch
    %9 = sbr.rel target = $region3
  $region8: #{gated_conv_transpose2d.1} parent=0 // loop_exit
    _

</llo_original>
